<compile_context>
chip_gen: v6e
topology: v6e:2x2x1
jax: 0.10.0
libtpu: 0.0.40
codegen_flags: <defaults>
</compile_context>

<pallas_src>
import jax
import jax.numpy as jnp
from jax import lax
from jax.experimental import pallas as pl
from jax.experimental.pallas import tpu as pltpu

BN_EPS = 1e-5


def context_gating_kernel(x_ref, w_ref, bn_ref, o_ref):
    # x_ref:  [N, F]  input slab
    # w_ref:  [F, F]  Linear weight, PyTorch [out, in] layout (f32 or bf16)
    # bn_ref: [2, F]  row 0 = gamma, row 1 = beta (f32)
    x = x_ref[...].astype(jnp.float32)

    w = w_ref[...]
    if w.dtype != jnp.bfloat16:
        # In-kernel cast: the f32 parameter is read from HBM exactly once; no
        # separate host-side convert (extra HBM write + re-read + op launch).
        w = w.astype(jnp.bfloat16)

    # Linear (no bias): contract x's feature dim against the weight's *input*
    # dim (dim 1), so the [out, in] weight is consumed with no transpose
    # anywhere. bf16 operands on the MXU, f32 accumulation.
    gates = lax.dot_general(
        x.astype(jnp.bfloat16), w,
        dimension_numbers=(((1,), (1,)), ((), ())),
        preferred_element_type=jnp.float32)

    # BatchNorm1d, training-mode batch statistics (biased variance), two-pass
    # form for numerical stability, folded into per-feature scale + shift.
    mean = jnp.mean(gates, axis=0, keepdims=True)                 # [1, F]
    centered = gates - mean
    var = jnp.mean(centered * centered, axis=0, keepdims=True)    # [1, F]
    gamma = bn_ref[0:1, :]
    beta = bn_ref[1:2, :]
    scale = gamma * lax.rsqrt(var + BN_EPS)                        # [1, F]

    # Sigmoid (EUP) + elementwise gate (VPU); all post-matmul math stays f32.
    gates = jax.nn.sigmoid(centered * scale + beta)
    o_ref[...] = (x * gates).astype(o_ref.dtype)


@jax.jit
def context_gating(x, weight, gamma, beta):
    """Single slab. x: [N, F]; weight: [F, F] (PyTorch [out, in]); gamma/beta: [F]."""
    N, F = x.shape
    bn = jnp.stack([gamma, beta]).astype(jnp.float32)             # [2, F], one DMA

    cost = pl.CostEstimate(
        flops=2 * N * F * F + 12 * N * F,                          # matmul + BN/gating
        transcendentals=N * F,                                     # sigmoid
        bytes_accessed=weight.dtype.itemsize * F * F + 2 * 4 * N * F + 4 * 2 * F,
    )

    # Grid-less, whole-array call: every operand lives in VMEM; no BlockSpec
    # pipelining machinery for a problem this small.
    return pl.pallas_call(
        context_gating_kernel,
        out_shape=jax.ShapeDtypeStruct((N, F), x.dtype),
        in_specs=[
            pl.BlockSpec(memory_space=pltpu.MemorySpace.VMEM),     # x
            pl.BlockSpec(memory_space=pltpu.MemorySpace.VMEM),     # weight
            pl.BlockSpec(memory_space=pltpu.MemorySpace.VMEM),     # gamma/beta packed
        ],
        out_specs=pl.BlockSpec(memory_space=pltpu.MemorySpace.VMEM),
        cost_estimate=cost,
    )(x, weight, bn)


@jax.jit
def context_gating_batched(x, weight, gamma, beta):
    """S independent slabs in one call. x: [S, N, F]; semantically identical to
    calling context_gating on each x[s] (each slab normalized over its own N).

    One pallas_call: weight + BN params DMA'd once and held VMEM-resident
    (index_map returns (0, 0) for every grid step), launch cost amortized over
    S, next slab's x DMA overlapped with current compute, and the segment axis
    marked "parallel" so v7x splits it across both TensorCores."""
    S, N, F = x.shape
    bn = jnp.stack([gamma, beta]).astype(jnp.float32)

    cost = pl.CostEstimate(
        flops=S * (2 * N * F * F + 12 * N * F),
        transcendentals=S * N * F,
        bytes_accessed=weight.dtype.itemsize * F * F + 2 * 4 * S * N * F + 4 * 2 * F,
    )

    return pl.pallas_call(
        context_gating_kernel,
        out_shape=jax.ShapeDtypeStruct((S, N, F), x.dtype),
        grid=(S,),
        in_specs=[
            pl.BlockSpec((None, N, F), lambda s: (s, 0, 0)),       # x slab s
            pl.BlockSpec((F, F), lambda s: (0, 0)),                # weight (resident)
            pl.BlockSpec((2, F), lambda s: (0, 0)),                # gamma/beta (resident)
        ],
        out_specs=pl.BlockSpec((None, N, F), lambda s: (s, 0, 0)),
        compiler_params=pltpu.CompilerParams(
            dimension_semantics=("parallel",)),
        cost_estimate=cost,
    )(x, weight, bn)


def context_gating_ref(x, weight, gamma, beta, *, mxu_dtype=jnp.float32):
    """Pure-JAX reference mirroring the PyTorch forward (training-mode BN).
    mxu_dtype lets the reference use the same bf16 matmul operands as the kernel."""
    gates = jnp.dot(x.astype(mxu_dtype), weight.astype(mxu_dtype).T,
                    preferred_element_type=jnp.float32)
    mean = jnp.mean(gates, axis=0, keepdims=True)
    var = jnp.mean((gates - mean) ** 2, axis=0, keepdims=True)
    gates = gamma * (gates - mean) / jnp.sqrt(var + BN_EPS) + beta
    gates = jax.nn.sigmoid(gates)
    return x * gates


if __name__ == "__main__":
    feature_size = 128   # output lane dim stays a multiple of 128
    batch = 16
    segments = 4         # independent slabs for the batched variant

    key = jax.random.PRNGKey(0)
    kx, kw, kg, kb, ks = jax.random.split(key, 5)

    # Deterministic synthetic parameters (shapes from __init__):
    #   gating_weights.weight: [feature_size, feature_size]
    #   bn.weight (gamma), bn.bias (beta): [feature_size]
    x = jax.random.normal(kx, (batch, feature_size), dtype=jnp.float32)
    weight = jax.random.normal(kw, (feature_size, feature_size), dtype=jnp.float32) * 0.05
    gamma = 1.0 + 0.1 * jax.random.normal(kg, (feature_size,), dtype=jnp.float32)
    beta = 0.1 * jax.random.normal(kb, (feature_size,), dtype=jnp.float32)

    # ---- single-slab path ----
    out = context_gating(x, weight, gamma, beta)
    jax.block_until_ready(out)
    assert out.shape == (batch, feature_size)

    # Tight check vs a reference using the same bf16 MXU operands (f32 accumulate).
    ref_bf16 = context_gating_ref(x, weight, gamma, beta, mxu_dtype=jnp.bfloat16)
    assert jnp.allclose(out, ref_bf16, atol=1e-4, rtol=1e-4), "mismatch vs bf16-matmul reference"

    # Sanity check vs the pure-f32 PyTorch-semantics reference (bf16 rounding only).
    ref_f32 = context_gating_ref(x, weight, gamma, beta)
    assert jnp.allclose(out, ref_f32, atol=3e-2, rtol=3e-2), "mismatch vs f32 reference"

    # ---- batched (segment-grid) path ----
    xs = jax.random.normal(ks, (segments, batch, feature_size), dtype=jnp.float32)
    out_b = context_gating_batched(xs, weight, gamma, beta)
    jax.block_until_ready(out_b)
    assert out_b.shape == (segments, batch, feature_size)
    for s in range(segments):
        ref_s = context_gating_ref(xs[s], weight, gamma, beta, mxu_dtype=jnp.bfloat16)
        assert jnp.allclose(out_b[s], ref_s, atol=1e-4, rtol=1e-4), f"batched slab {s} mismatch"

    print("KERNEL_OK")
</pallas_src>

<mosaic_0001>
module attributes {stable_mosaic.version = 11 : i64} {
  func.func @context_gating_kernel(%arg0: memref<16x128xf32, #tpu.memory_space<vmem>>, %arg1: memref<128x128xf32, #tpu.memory_space<vmem>>, %arg2: memref<2x128xf32, #tpu.memory_space<vmem>>, %arg3: memref<16x128xf32, #tpu.memory_space<vmem>>) attributes {dimension_semantics = [], scalar_prefetch = 0 : i64, scratch_operands = 0 : i64, tpu.core_type = #tpu.core_type<tc>} {
    %c0 = arith.constant 0 : index
    %c0_0 = arith.constant 0 : index
    %0 = vector.load %arg0[%c0, %c0_0] : memref<16x128xf32, #tpu.memory_space<vmem>>, vector<16x128xf32>
    %c0_1 = arith.constant 0 : index
    %c0_2 = arith.constant 0 : index
    %1 = vector.load %arg1[%c0_1, %c0_2] : memref<128x128xf32, #tpu.memory_space<vmem>>, vector<128x128xf32>
    %2 = arith.truncf %1 : vector<128x128xf32> to vector<128x128xbf16>
    %3 = arith.truncf %0 : vector<16x128xf32> to vector<16x128xbf16>
    %cst = arith.constant dense<0.000000e+00> : vector<16x128xf32>
    %4 = tpu.matmul %3, %2, %cst {dimension_numbers = #tpu.dot_dimension_numbers<[1], [1], [0], [0], [0, 0, 1, 0], [], []>} : vector<16x128xbf16>, vector<128x128xbf16>, vector<16x128xf32> -> vector<16x128xf32>
    %cst_3 = arith.constant dense<0.000000e+00> : vector<128xf32>
    %5 = vector.multi_reduction <add>, %4, %cst_3 [0] : vector<16x128xf32> to vector<128xf32>
    %6 = vector.shape_cast %5 : vector<128xf32> to vector<1x128xf32>
    %cst_4 = arith.constant 1.600000e+01 : f32
    %7 = vector.broadcast %cst_4 : f32 to vector<1x128xf32>
    %8 = arith.divf %6, %7 : vector<1x128xf32>
    %9 = vector.broadcast %8 : vector<1x128xf32> to vector<16x128xf32>
    %10 = arith.subf %4, %9 : vector<16x128xf32>
    %11 = arith.mulf %10, %10 : vector<16x128xf32>
    %cst_5 = arith.constant dense<0.000000e+00> : vector<128xf32>
    %12 = vector.multi_reduction <add>, %11, %cst_5 [0] : vector<16x128xf32> to vector<128xf32>
    %13 = vector.shape_cast %12 : vector<128xf32> to vector<1x128xf32>
    %cst_6 = arith.constant 1.600000e+01 : f32
    %14 = vector.broadcast %cst_6 : f32 to vector<1x128xf32>
    %15 = arith.divf %13, %14 : vector<1x128xf32>
    %c0_7 = arith.constant 0 : index
    %c0_8 = arith.constant 0 : index
    %16 = vector.load %arg2[%c0_7, %c0_8] : memref<2x128xf32, #tpu.memory_space<vmem>>, vector<1x128xf32>
    %c1 = arith.constant 1 : index
    %c0_9 = arith.constant 0 : index
    %17 = vector.load %arg2[%c1, %c0_9] : memref<2x128xf32, #tpu.memory_space<vmem>>, vector<1x128xf32>
    %cst_10 = arith.constant 9.99999974E-6 : f32
    %18 = vector.broadcast %cst_10 : f32 to vector<1x128xf32>
    %19 = arith.addf %15, %18 : vector<1x128xf32>
    %20 = math.rsqrt %19 : vector<1x128xf32>
    %21 = arith.mulf %16, %20 : vector<1x128xf32>
    %22 = vector.broadcast %21 : vector<1x128xf32> to vector<16x128xf32>
    %23 = arith.mulf %10, %22 : vector<16x128xf32>
    %24 = vector.broadcast %17 : vector<1x128xf32> to vector<16x128xf32>
    %25 = arith.addf %23, %24 : vector<16x128xf32>
    %26 = arith.negf %25 : vector<16x128xf32>
    %27 = math.exp %26 : vector<16x128xf32>
    %cst_11 = arith.constant 1.000000e+00 : f32
    %28 = vector.broadcast %cst_11 : f32 to vector<16x128xf32>
    %29 = arith.addf %28, %27 : vector<16x128xf32>
    %30 = arith.divf %28, %29 : vector<16x128xf32>
    %31 = arith.mulf %0, %30 : vector<16x128xf32>
    %c0_12 = arith.constant 0 : index
    %c0_13 = arith.constant 0 : index
    %32 = vector.load %arg3[%c0_12, %c0_13] : memref<16x128xf32, #tpu.memory_space<vmem>>, vector<16x128xf32>
    tpu.vector_store %arg3[%c0_12, %c0_13], %31 {strides = array<i32>} : memref<16x128xf32, #tpu.memory_space<vmem>>, vector<16x128xf32>,
    return
  }
}

</mosaic_0001>

<llo_original>
// kernel: context_gating.1
$region0: #{context_gating.1}
  #allocation0 [shape = 'u32[]', space=smem, size = 0x4, offset = 0x4, fixed_abs, tag = 'smem constant byte address 0x4 - core index']
  #allocation1 [shape = 'u32[144,128]{1,0:T(1,128)}', space=vmem, size = 0x12000, scoped, tag = 'internal scratch']
  %s0 = inlined_call_operand.hbm [shape: f32[16,128], index: 0, kind: input, shape index: {}]
  %s1 = inlined_call_operand.hbm [shape: f32[128,128], index: 1, kind: input, shape index: {}]
  %s2 = inlined_call_operand.vmem [shape: f32[2,128], index: 2, kind: input, shape index: {}]
  %s3 = inlined_call_operand.hbm [shape: f32[16,128], index: 3, kind: output, shape index: {}]
  %s4 = sld [smem:[#allocation0]]
  $region30: #{context_gating.1} parent=0
    _
  %s6 = ssub.s32 1, %s4
  %s7 = scalar_select 0, %s6, %s4
  $region1: #{context_gating.1} parent=0
    #allocation2 [shape = 'u8[8192]{0}', space=vmem, size = 0x2000, scoped, tag = 'input window, operand 0, single buffered']
    #allocation3 [shape = 's32[1]{0}', space=sflag, size = 0x4, scoped, tag = 'scoped memory for context_gating.1']
    #allocation4 [shape = 's32[1]{0}', space=sflag, size = 0x4, scoped, tag = 'scoped memory for context_gating.1']
    #allocation5 [shape = 'u8[65536]{0}', space=vmem, size = 0x10000, scoped, tag = 'input window, operand 1, single buffered']
    #allocation6 [shape = 's32[1]{0}', space=sflag, size = 0x4, scoped, tag = 'scoped memory for context_gating.1']
    #allocation7 [shape = 'u8[8192]{0}', space=vmem, size = 0x2000, scoped, tag = 'output window, operand 0, single buffered']
    %8 = vsyncpa [#allocation3], 0
    %9 = vsyncpa [#allocation6], 0
    %10 = vsyncpa [#allocation4], 0
    // Predicated region
    $region2: #{context_gating.1} parent=1 // pred_check
      _
    $region3: #{context_gating.1} parent=1 // pred_check_branch
      %12 = sbr.rel (0) target = $region5
    $region4: #{context_gating.1} parent=1 // pred_region
      %s14 = ssub.s32 256, 256
      %15 = vsyncadd [#allocation3], %s14
      %s16 = sshll.u32 [#allocation2], 4
      %s17 = int_to_ptr.vmem [resolvable:$true] %s16
      %22 = dma.hbm_to_vmem [thread:$0]  %s0, 256, %s17, [#allocation3], 128, 128, 8
    $region5: #{context_gating.1} parent=1 // pred_fallthru
      _
    // Predicated region
    $region6: #{context_gating.1} parent=1 // pred_check
      _
    $region7: #{context_gating.1} parent=1 // pred_check_branch
      %24 = sbr.rel (0) target = $region9
    $region8: #{context_gating.1} parent=1 // pred_region
      %s26 = ssub.s32 2048, 2048
      %27 = vsyncadd [#allocation6], %s26
      %s28 = sshll.u32 [#allocation5], 4
      %s29 = int_to_ptr.vmem [resolvable:$true] %s28
      %34 = dma.hbm_to_vmem [thread:$0]  %s1, 2048, %s29, [#allocation6], 128, 128, 8
    $region9: #{context_gating.1} parent=1 // pred_fallthru
      _
    // Predicated region
    $region10: #{context_gating.1} parent=1 // pred_check
      _
    $region11: #{context_gating.1} parent=1 // pred_check_branch
      %36 = sbr.rel (0) target = $region13
    $region12: #{context_gating.1} parent=1 // pred_region
      _
    $region13: #{context_gating.1} parent=1 // pred_fallthru
      _
    // Predicated region
    $region14: #{context_gating.1} parent=1 // pred_check
      _
    $region15: #{context_gating.1} parent=1 // pred_check_branch
      %38 = sbr.rel (0) target = $region17
    $region16: #{context_gating.1} parent=1 // pred_region
      %39 = dma.done [#allocation3], 256
    $region17: #{context_gating.1} parent=1 // pred_fallthru
      _
    // Predicated region
    $region18: #{context_gating.1} parent=1 // pred_check
      _
    $region19: #{context_gating.1} parent=1 // pred_check_branch
      %41 = sbr.rel (0) target = $region21
    $region20: #{context_gating.1} parent=1 // pred_region
      %42 = dma.done [#allocation6], 2048
    $region21: #{context_gating.1} parent=1 // pred_fallthru
      _
    %v44 = vld [vmem:[#allocation2] sm:$0xff]
    %v45 = vld [vmem:[#allocation2 + $0x8] sm:$0xff]
    %v46 = vld [vmem:[#allocation5] sm:$0xff]
    %v47 = vld [vmem:[#allocation5 + $0x8] sm:$0xff]
    %v48 = vld [vmem:[#allocation5 + $0x10] sm:$0xff]
    %v49 = vld [vmem:[#allocation5 + $0x18] sm:$0xff]
    %v50 = vld [vmem:[#allocation5 + $0x20] sm:$0xff]
    %v51 = vld [vmem:[#allocation5 + $0x28] sm:$0xff]
    %v52 = vld [vmem:[#allocation5 + $0x30] sm:$0xff]
    %v53 = vld [vmem:[#allocation5 + $0x38] sm:$0xff]
    %v54 = vld [vmem:[#allocation5 + $0x40] sm:$0xff]
    %v55 = vld [vmem:[#allocation5 + $0x48] sm:$0xff]
    %v56 = vld [vmem:[#allocation5 + $0x50] sm:$0xff]
    %v57 = vld [vmem:[#allocation5 + $0x58] sm:$0xff]
    %v58 = vld [vmem:[#allocation5 + $0x60] sm:$0xff]
    %v59 = vld [vmem:[#allocation5 + $0x68] sm:$0xff]
    %v60 = vld [vmem:[#allocation5 + $0x70] sm:$0xff]
    %v61 = vld [vmem:[#allocation5 + $0x78] sm:$0xff]
    %v62 = vpack.c.bf16 %v47, %v46
    %v63 = vpack.c.bf16 %v49, %v48
    %v64 = vpack.c.bf16 %v51, %v50
    %v65 = vpack.c.bf16 %v53, %v52
    %v66 = vpack.c.bf16 %v55, %v54
    %v67 = vpack.c.bf16 %v57, %v56
    %v68 = vpack.c.bf16 %v59, %v58
    %v69 = vpack.c.bf16 %v61, %v60
    %v70 = vpack.c.bf16 %v45, %v44
    %71 = vmatprep.subr.bf16.mxu0 0
    %72 = vmatpush1.bf16.xpose.msra.mxu0 %v69
    %73 = vmatprep.subr.bf16.mxu0 0
    %74 = vmatpush1.bf16.xpose.msra.mxu0 %v68
    %75 = vmatprep.subr.bf16.mxu0 0
    %76 = vmatpush1.bf16.xpose.msra.mxu0 %v67
    %77 = vmatprep.subr.bf16.mxu0 0
    %78 = vmatpush1.bf16.xpose.msra.mxu0 %v66
    %79 = vmatprep.subr.bf16.mxu0 0
    %80 = vmatpush1.bf16.xpose.msra.mxu0 %v65
    %81 = vmatprep.subr.bf16.mxu0 0
    %82 = vmatpush1.bf16.xpose.msra.mxu0 %v64
    %83 = vmatprep.subr.bf16.mxu0 0
    %84 = vmatpush1.bf16.xpose.msra.mxu0 %v63
    %85 = vmatprep.subr.bf16.mxu0 0
    %86 = vmatpush1.bf16.xpose.msra.mxu0 %v62
    %87 = vmatprep.subr.bf16.mxu0 0
    %88 = vmatpush2.bf16.xpose.msra.mxu0 0
    %89 = vmatprep.subr.bf16.mxu0 0
    %90 = vmatpush2.bf16.xpose.msra.mxu0 0
    %91 = vmatprep.subr.bf16.mxu0 0
    %92 = vmatpush2.bf16.xpose.msra.mxu0 0
    %93 = vmatprep.subr.bf16.mxu0 0
    %94 = vmatpush2.bf16.xpose.msra.mxu0 0
    %95 = vmatprep.subr.bf16.mxu0 0
    %96 = vmatpush2.bf16.xpose.msra.mxu0 0
    %97 = vmatprep.subr.bf16.mxu0 0
    %98 = vmatpush2.bf16.xpose.msra.mxu0 0
    %99 = vmatprep.subr.bf16.mxu0 0
    %100 = vmatpush2.bf16.xpose.msra.mxu0 0
    %101 = vmatprep.subr.bf16.mxu0 0
    %102 = vmatpush2.bf16.xpose.msra.mxu0 0
    %103 = vmatprep.mubr.bf16.mxu0 0
    %104 = vmatmul.mubr.bf16.gmra.mxu0 %v70
    %v105 = vpop.f32.mrf.mxu0
    %v106 = vadd.f32 0.0, %v105
    %v107 = vpop.f32.mrf.mxu0
    %v108 = vpop.f32.mrf.mxu0
    %v109 = vadd.f32 0.0, %v108
    %v110 = vpop.f32.mrf.mxu0
    %111 = vdwg.mxu0
    %v112 = vadd.f32 %v106, %v109
    %v113 = vrot.slane %v112, 4
    %v114 = vadd.f32 %v112, %v113
    %v115 = vrot.slane %v114, 2
    %v116 = vadd.f32 %v114, %v115
    %v117 = vrot.slane %v116, 1
    %v118 = vadd.f32 %v116, %v117
    %v119 = vrcp.pop 16.0
    %v120 = vmul.f32 %v118, %v119
    %v121 = vsub.f32 %v106, %v120
    %v122 = vsub.f32 %v109, %v120
    %v123 = vmul.f32 %v121, %v121
    %v124 = vmul.f32 %v122, %v122
    %v125 = vadd.f32 %v123, %v124
    %v126 = vrot.slane %v125, 4
    %v127 = vadd.f32 %v125, %v126
    %v128 = vrot.slane %v127, 2
    %v129 = vadd.f32 %v127, %v128
    %v130 = vrot.slane %v129, 1
    %v131 = vadd.f32 %v129, %v130
    %v132 = vmul.f32 %v131, %v119
    %v133 = vld [vmem:[%s2] sm:$0x1]
    %v134 = vld [vmem:[%s2 + $0x1] sm:$0x1]
    %v135 = vadd.f32 %v132, 1e-05
    %v136 = vrsqrt.pop %v135
    %v137 = vmul.f32 %v133, %v136
    %v138 = vlaneseq
    %v139 = vshrl.u32 %v138, 7
    %v140 = vsub.s32 0, %v139
    %v141 = vrot.slane %v137, %v140
    %v142 = vmul.f32 %v121, %v141
    %v143 = vmul.f32 %v122, %v141
    %v144 = vlaneseq
    %v145 = vshrl.u32 %v144, 7
    %v146 = vsub.s32 0, %v145
    %v147 = vrot.slane %v134, %v146
    %v148 = vadd.f32 %v142, %v147
    %v149 = vadd.f32 %v143, %v147
    %v150 = vxor.u32 %v148, 2147483648
    %v151 = vxor.u32 %v149, 2147483648
    %v152 = vmul.f32 %v150, 1.442695
    %v153 = vpow.pop %v152
    %v154 = vmul.f32 %v151, 1.442695
    %v155 = vpow.pop %v154
    %v156 = vadd.f32 %v153, 1.0
    %v157 = vadd.f32 %v155, 1.0
    %v158 = vrcp.pop %v156
    %v159 = vmul.f32 1.0, %v158
    %v160 = vrcp.pop %v157
    %v161 = vmul.f32 1.0, %v160
    %v162 = vmul.f32 %v44, %v159
    %v163 = vmul.f32 %v45, %v161
    %164 = vst [vmem:[#allocation7] sm:$0xff] %v162
    %165 = vst [vmem:[#allocation7 + $0x8] sm:$0xff] %v163
    // Predicated region
    $region22: #{context_gating.1} parent=1 // pred_check
      _
    $region23: #{context_gating.1} parent=1 // pred_check_branch
      %167 = sbr.rel (0) target = $region25
    $region24: #{context_gating.1} parent=1 // pred_region
      %s169 = ssub.s32 256, 256
      %170 = vsyncadd [#allocation4], %s169
      %s171 = sshll.u32 [#allocation7], 4
      %s172 = int_to_ptr.vmem [resolvable:$true] %s171
      %177 = dma.vmem_to_hbm [thread:$0]  %s172, 256, %s3, [#allocation4], 128, 128, 8
    $region25: #{context_gating.1} parent=1 // pred_fallthru
      _
    // Predicated region
    $region26: #{context_gating.1} parent=1 // pred_check
      _
    $region27: #{context_gating.1} parent=1 // pred_check_branch
      %179 = sbr.rel (0) target = $region29
    $region28: #{context_gating.1} parent=1 // pred_region
      %180 = dma.done [#allocation4], 256
    $region29: #{context_gating.1} parent=1 // pred_fallthru
      _
    %181 = vsyncpa [#allocation3], 1
    %182 = vsyncpa [#allocation6], 1
    %183 = vsyncpa [#allocation4], 1

</llo_original>
